<compile_context>
chip_gen: v6e
topology: v6e:2x2x1
jax: 0.10.0
libtpu: 0.0.40
codegen_flags: <defaults>
</compile_context>

<pallas_src>
import jax
import jax.numpy as jnp
from jax.experimental import pallas as pl
from jax.experimental.pallas import tpu as pltpu


def _round_up(n, m):
    return ((n + m - 1) // m) * m


def mlp_kernel(x_ref, w2_ref, b2_ref, w3_ref, b3_ref, o_ref):
    # In-kernel bf16 cast of the streamed f32 activation tile (VPU work hidden
    # under the HBM stream); both matmuls accumulate in f32 on the MXU.
    x = x_ref[...].astype(jnp.bfloat16)
    h = jnp.dot(x, w2_ref[...], preferred_element_type=jnp.float32)
    # Bias add + ReLU in f32 (implicit (1,128) broadcast; v5e-safe epilogue).
    h = jnp.maximum(h + b2_ref[...], 0.0)
    y = jnp.dot(h.astype(jnp.bfloat16), w3_ref[...],
                preferred_element_type=jnp.float32)
    y = jnp.maximum(y + b3_ref[...], 0.0)
    o_ref[...] = y.astype(o_ref.dtype)


def _choose_batch_tile(B, block_b):
    # Cap tiles so double-buffered f32 input stays small vs v7x's 64 MiB VMEM
    # (tb=4096 -> ~16 MiB of x buffers + <1 MiB weights/output/bias buffers).
    block_b = min(block_b, 4096)
    tb = min(block_b, _round_up(B, 8))
    # For large batches split into >=8 grid steps (each >=1024 rows, so per-step
    # pipeline overhead stays amortized) so the "parallel" axis can be sharded
    # across v7x's two TensorCores; no effect on single-TC v5e/v6e.
    if B >= 8 * 1024:
        tb = min(tb, max(1024, _round_up(pl.cdiv(B, 8), 8)))
    return tb


def mlp_classifier_forward(x, w2, b2, w3, b3, *, block_b=2048):
    """x: (B, 512) f32; w2: (512, 128); b2: (1, 128); w3: (128, 10); b3: (1, 10).

    Weights are passed pre-transposed as (in_features, out_features).
    Returns (B, 10) f32 logits = relu(relu(x @ w2 + b2) @ w3 + b3).
    """
    B, in_dim = x.shape
    hid = w2.shape[1]          # 128
    out_dim = w3.shape[1]      # 10

    # Resident operands: tiny one-time bf16 cast of the weights; biases stay f32.
    w2b = w2.astype(jnp.bfloat16)
    w3b = w3.astype(jnp.bfloat16)
    b2f = b2.astype(jnp.float32).reshape(1, hid)
    b3f = b3.astype(jnp.float32).reshape(1, out_dim)

    tb = _choose_batch_tile(B, block_b)
    grid = (pl.cdiv(B, tb),)   # Pallas masks the tail block; no jnp.pad copy.

    out = pl.pallas_call(
        mlp_kernel,
        out_shape=jax.ShapeDtypeStruct((B, out_dim), jnp.float32),
        grid_spec=pl.GridSpec(
            grid=grid,
            in_specs=[
                pl.BlockSpec((tb, in_dim), lambda i: (i, 0)),    # x tile (streamed f32)
                pl.BlockSpec((in_dim, hid), lambda i: (0, 0)),   # W2 bf16 (resident)
                pl.BlockSpec((1, hid), lambda i: (0, 0)),        # b2 f32 (resident)
                pl.BlockSpec((hid, out_dim), lambda i: (0, 0)),  # W3 bf16 (resident)
                pl.BlockSpec((1, out_dim), lambda i: (0, 0)),    # b3 f32 (resident)
            ],
            # (tb, 10) block equals the full last dim -> legal; 40 B/row writeback.
            out_specs=pl.BlockSpec((tb, out_dim), lambda i: (i, 0)),
        ),
        compiler_params=pltpu.CompilerParams(
            dimension_semantics=("parallel",),
            vmem_limit_bytes=32 * 1024 * 1024,
        ),
    )(x, w2b, b2f, w3b, b3f)
    return out


def init_params(key):
    """Deterministic init mimicking nn.Linear default (uniform +/- 1/sqrt(fan_in))."""
    k1, k2, k3, k4 = jax.random.split(key, 4)
    lim2 = 1.0 / jnp.sqrt(512.0)
    lim3 = 1.0 / jnp.sqrt(128.0)
    # Stored already transposed to (in, out) for the kernel.
    w2 = jax.random.uniform(k1, (512, 128), jnp.float32, -lim2, lim2)
    b2 = jax.random.uniform(k2, (1, 128), jnp.float32, -lim2, lim2)
    w3 = jax.random.uniform(k3, (128, 10), jnp.float32, -lim3, lim3)
    b3 = jax.random.uniform(k4, (1, 10), jnp.float32, -lim3, lim3)
    return w2, b2, w3, b3


if __name__ == "__main__":
    key = jax.random.PRNGKey(0)
    kx, kp = jax.random.split(key)
    B = 8
    x = jax.random.normal(kx, (B, 512), jnp.float32)
    w2, b2, w3, b3 = init_params(kp)

    out = mlp_classifier_forward(x, w2, b2, w3, b3)
    out = jax.block_until_ready(out)

    # Pure-JAX f32 reference; loose tolerance covers the in-kernel bf16 casts.
    ref = jnp.maximum(jnp.maximum(x @ w2 + b2, 0.0) @ w3 + b3, 0.0)
    assert out.shape == (B, 10)
    assert bool(jnp.all(jnp.isfinite(out)))
    assert jnp.allclose(out, ref, atol=3e-2, rtol=3e-2)

    print("KERNEL_OK")
</pallas_src>

<mosaic_0001>
module attributes {stable_mosaic.version = 11 : i64} {
  func.func @mlp_kernel(%arg0: i32, %arg1: memref<8x512xf32, #tpu.memory_space<vmem>>, %arg2: memref<512x128xbf16, #tpu.memory_space<vmem>>, %arg3: memref<1x128xf32, #tpu.memory_space<vmem>>, %arg4: memref<128x10xbf16, #tpu.memory_space<vmem>>, %arg5: memref<1x10xf32, #tpu.memory_space<vmem>>, %arg6: memref<8x10xf32, #tpu.memory_space<vmem>>) attributes {dimension_semantics = [#tpu.dimension_semantics<parallel>], iteration_bounds = array<i64: 1>, scalar_prefetch = 0 : i64, scratch_operands = 0 : i64, tpu.core_type = #tpu.core_type<tc>, window_params = [{transform_indices = @transform_0, window_bounds = array<i64: 8, 512>}, {pipeline_mode = #tpu.pipeline_mode<synchronous>, transform_indices = @transform_1, window_bounds = array<i64: 512, 128>}, {pipeline_mode = #tpu.pipeline_mode<synchronous>, transform_indices = @transform_2, window_bounds = array<i64: 1, 128>}, {pipeline_mode = #tpu.pipeline_mode<synchronous>, transform_indices = @transform_3, window_bounds = array<i64: 128, 10>}, {pipeline_mode = #tpu.pipeline_mode<synchronous>, transform_indices = @transform_4, window_bounds = array<i64: 1, 10>}, {transform_indices = @transform_5, window_bounds = array<i64: 8, 10>}]} {
    %c0 = arith.constant 0 : index
    %c0_0 = arith.constant 0 : index
    %0 = vector.load %arg1[%c0, %c0_0] : memref<8x512xf32, #tpu.memory_space<vmem>>, vector<8x512xf32>
    %1 = arith.truncf %0 : vector<8x512xf32> to vector<8x512xbf16>
    %c0_1 = arith.constant 0 : index
    %c0_2 = arith.constant 0 : index
    %2 = vector.load %arg2[%c0_1, %c0_2] : memref<512x128xbf16, #tpu.memory_space<vmem>>, vector<512x128xbf16>
    %cst = arith.constant dense<0.000000e+00> : vector<8x128xf32>
    %3 = tpu.matmul %1, %2, %cst {dimension_numbers = #tpu.dot_dimension_numbers<[1], [0], [0], [1], [0, 0, 1, 1], [], []>} : vector<8x512xbf16>, vector<512x128xbf16>, vector<8x128xf32> -> vector<8x128xf32>
    %c0_3 = arith.constant 0 : index
    %c0_4 = arith.constant 0 : index
    %4 = vector.load %arg3[%c0_3, %c0_4] : memref<1x128xf32, #tpu.memory_space<vmem>>, vector<1x128xf32>
    %5 = vector.broadcast %4 : vector<1x128xf32> to vector<8x128xf32>
    %6 = arith.addf %3, %5 : vector<8x128xf32>
    %cst_5 = arith.constant 0.000000e+00 : f32
    %7 = vector.broadcast %cst_5 : f32 to vector<8x128xf32>
    %8 = arith.maximumf %6, %7 : vector<8x128xf32>
    %9 = arith.truncf %8 : vector<8x128xf32> to vector<8x128xbf16>
    %c0_6 = arith.constant 0 : index
    %c0_7 = arith.constant 0 : index
    %10 = vector.load %arg4[%c0_6, %c0_7] : memref<128x10xbf16, #tpu.memory_space<vmem>>, vector<128x10xbf16>
    %cst_8 = arith.constant dense<0.000000e+00> : vector<8x10xf32>
    %11 = tpu.matmul %9, %10, %cst_8 {dimension_numbers = #tpu.dot_dimension_numbers<[1], [0], [0], [1], [0, 0, 1, 1], [], []>} : vector<8x128xbf16>, vector<128x10xbf16>, vector<8x10xf32> -> vector<8x10xf32>
    %c0_9 = arith.constant 0 : index
    %c0_10 = arith.constant 0 : index
    %12 = vector.load %arg5[%c0_9, %c0_10] : memref<1x10xf32, #tpu.memory_space<vmem>>, vector<1x10xf32>
    %13 = vector.broadcast %12 : vector<1x10xf32> to vector<8x10xf32>
    %14 = arith.addf %11, %13 : vector<8x10xf32>
    %cst_11 = arith.constant 0.000000e+00 : f32
    %15 = vector.broadcast %cst_11 : f32 to vector<8x10xf32>
    %16 = arith.maximumf %14, %15 : vector<8x10xf32>
    %c0_12 = arith.constant 0 : index
    %c0_13 = arith.constant 0 : index
    %17 = vector.load %arg6[%c0_12, %c0_13] : memref<8x10xf32, #tpu.memory_space<vmem>>, vector<8x10xf32>
    tpu.vector_store %arg6[%c0_12, %c0_13], %16 {strides = array<i32>} : memref<8x10xf32, #tpu.memory_space<vmem>>, vector<8x10xf32>,
    return
  }
  func.func @transform_0(%arg0: i32) -> (i32, i32) {
    %c0_i32 = arith.constant 0 : i32
    %c0_i32_0 = arith.constant 0 : i32
    return %arg0, %c0_i32 : i32, i32
  }
  func.func @transform_1(%arg0: i32) -> (i32, i32) {
    %c0_i32 = arith.constant 0 : i32
    %c0_i32_0 = arith.constant 0 : i32
    %c0_i32_1 = arith.constant 0 : i32
    return %c0_i32, %c0_i32_0 : i32, i32
  }
  func.func @transform_2(%arg0: i32) -> (i32, i32) {
    %c0_i32 = arith.constant 0 : i32
    %c0_i32_0 = arith.constant 0 : i32
    %c0_i32_1 = arith.constant 0 : i32
    return %c0_i32, %c0_i32_0 : i32, i32
  }
  func.func @transform_3(%arg0: i32) -> (i32, i32) {
    %c0_i32 = arith.constant 0 : i32
    %c0_i32_0 = arith.constant 0 : i32
    %c0_i32_1 = arith.constant 0 : i32
    return %c0_i32, %c0_i32_0 : i32, i32
  }
  func.func @transform_4(%arg0: i32) -> (i32, i32) {
    %c0_i32 = arith.constant 0 : i32
    %c0_i32_0 = arith.constant 0 : i32
    %c0_i32_1 = arith.constant 0 : i32
    return %c0_i32, %c0_i32_0 : i32, i32
  }
  func.func @transform_5(%arg0: i32) -> (i32, i32) {
    %c0_i32 = arith.constant 0 : i32
    %c0_i32_0 = arith.constant 0 : i32
    return %arg0, %c0_i32 : i32, i32
  }
}

</mosaic_0001>

<llo_original>
// kernel: tpu_custom_call.1
$region0: #{tpu_custom_call.1}
  #allocation0 [shape = 'u32[]', space=smem, size = 0x4, offset = 0x4, fixed_abs, tag = 'smem constant byte address 0x4 - core index']
  #allocation1 [shape = 'u32[144,128]{1,0:T(1,128)}', space=vmem, size = 0x12000, scoped, tag = 'internal scratch']
  %s0 = inlined_call_operand.vmem [shape: f32[8,512], index: 0, kind: input, shape index: {}]
  %s1 = inlined_call_operand.hbm [shape: bf16[512,128], index: 1, kind: input, shape index: {}]
  %s2 = inlined_call_operand.vmem [shape: f32[1,128], index: 2, kind: input, shape index: {}]
  %s3 = inlined_call_operand.vmem [shape: bf16[128,10], index: 3, kind: input, shape index: {}]
  %s4 = inlined_call_operand.vmem [shape: f32[1,10], index: 4, kind: input, shape index: {}]
  %s5 = inlined_call_operand.hbm [shape: f32[8,10], index: 5, kind: output, shape index: {}]
  %s6 = sld [smem:[#allocation0]]
  $region34: #{tpu_custom_call.1} parent=0
    _
  %s8 = ssub.s32 1, %s6
  %s9 = scalar_select 0, %s8, %s6
  $region1: #{tpu_custom_call.1} parent=0
    #allocation2 [shape = 'u8[131072]{0}', space=vmem, size = 0x20000, scoped, tag = 'input window, operand 1, single buffered']
    #allocation3 [shape = 's32[1]{0}', space=sflag, size = 0x4, scoped, tag = 'scoped memory for tpu_custom_call.1']
    #allocation4 [shape = 's32[1]{0}', space=sflag, size = 0x4, scoped, tag = 'scoped memory for tpu_custom_call.1']
    #allocation5 [shape = 'u8[4096]{0}', space=vmem, size = 0x1000, scoped, tag = 'output window, operand 0, single buffered']
    %10 = vsyncpa [#allocation3], 0
    %11 = vsyncpa [#allocation4], 0
    // Predicated region
    $region2: #{tpu_custom_call.1} parent=1 // pred_check
      _
    $region3: #{tpu_custom_call.1} parent=1 // pred_check_branch
      %13 = sbr.rel (0) target = $region5
    $region4: #{tpu_custom_call.1} parent=1 // pred_region
      _
    $region5: #{tpu_custom_call.1} parent=1 // pred_fallthru
      _
    // Predicated region
    $region6: #{tpu_custom_call.1} parent=1 // pred_check
      _
    $region7: #{tpu_custom_call.1} parent=1 // pred_check_branch
      %15 = sbr.rel (0) target = $region9
    $region8: #{tpu_custom_call.1} parent=1 // pred_region
      %s17 = ssub.s32 4096, 4096
      %18 = vsyncadd [#allocation3], %s17
      %s19 = sshll.u32 [#allocation2], 4
      %s20 = int_to_ptr.vmem [resolvable:$true] %s19
      %25 = dma.hbm_to_vmem [thread:$0]  %s1, 4096, %s20, [#allocation3], 64, 64, 4
    $region9: #{tpu_custom_call.1} parent=1 // pred_fallthru
      _
    // Predicated region
    $region10: #{tpu_custom_call.1} parent=1 // pred_check
      _
    $region11: #{tpu_custom_call.1} parent=1 // pred_check_branch
      %27 = sbr.rel (0) target = $region13
    $region12: #{tpu_custom_call.1} parent=1 // pred_region
      _
    $region13: #{tpu_custom_call.1} parent=1 // pred_fallthru
      _
    // Predicated region
    $region14: #{tpu_custom_call.1} parent=1 // pred_check
      _
    $region15: #{tpu_custom_call.1} parent=1 // pred_check_branch
      %29 = sbr.rel (0) target = $region17
    $region16: #{tpu_custom_call.1} parent=1 // pred_region
      _
    $region17: #{tpu_custom_call.1} parent=1 // pred_fallthru
      _
    // Predicated region
    $region18: #{tpu_custom_call.1} parent=1 // pred_check
      _
    $region19: #{tpu_custom_call.1} parent=1 // pred_check_branch
      %31 = sbr.rel (0) target = $region21
    $region20: #{tpu_custom_call.1} parent=1 // pred_region
      _
    $region21: #{tpu_custom_call.1} parent=1 // pred_fallthru
      _
    // Predicated region
    $region22: #{tpu_custom_call.1} parent=1 // pred_check
      _
    $region23: #{tpu_custom_call.1} parent=1 // pred_check_branch
      %33 = sbr.rel (0) target = $region25
    $region24: #{tpu_custom_call.1} parent=1 // pred_region
      %34 = dma.done [#allocation3], 4096
    $region25: #{tpu_custom_call.1} parent=1 // pred_fallthru
      _
    %v36 = vld [vmem:[%s0] sm:$0xff]
    %v37 = vld [vmem:[%s0 + $0x8] sm:$0xff]
    %v38 = vld [vmem:[%s0 + $0x10] sm:$0xff]
    %v39 = vld [vmem:[%s0 + $0x18] sm:$0xff]
    %v40 = vpack.c.bf16 %v36, %v36
    %v41 = vpack.c.bf16 %v37, %v37
    %v42 = vpack.c.bf16 %v38, %v38
    %v43 = vpack.c.bf16 %v39, %v39
    %v44 = vld [vmem:[#allocation2] sm:$0xf]
    %v45 = vld [vmem:[#allocation2 + $0x4] sm:$0xf]
    %v46 = vld [vmem:[#allocation2 + $0x8] sm:$0xf]
    %v47 = vld [vmem:[#allocation2 + $0xc] sm:$0xf]
    %v48 = vld [vmem:[#allocation2 + $0x10] sm:$0xf]
    %v49 = vld [vmem:[#allocation2 + $0x14] sm:$0xf]
    %v50 = vld [vmem:[#allocation2 + $0x18] sm:$0xf]
    %v51 = vld [vmem:[#allocation2 + $0x1c] sm:$0xf]
    %v52 = vld [vmem:[#allocation2 + $0x20] sm:$0xf]
    %v53 = vld [vmem:[#allocation2 + $0x24] sm:$0xf]
    %v54 = vld [vmem:[#allocation2 + $0x28] sm:$0xf]
    %v55 = vld [vmem:[#allocation2 + $0x2c] sm:$0xf]
    %v56 = vld [vmem:[#allocation2 + $0x30] sm:$0xf]
    %v57 = vld [vmem:[#allocation2 + $0x34] sm:$0xf]
    %v58 = vld [vmem:[#allocation2 + $0x38] sm:$0xf]
    %v59 = vld [vmem:[#allocation2 + $0x3c] sm:$0xf]
    %v60 = vld [vmem:[#allocation2 + $0x40] sm:$0xf]
    %v61 = vld [vmem:[#allocation2 + $0x44] sm:$0xf]
    %v62 = vld [vmem:[#allocation2 + $0x48] sm:$0xf]
    %v63 = vld [vmem:[#allocation2 + $0x4c] sm:$0xf]
    %v64 = vld [vmem:[#allocation2 + $0x50] sm:$0xf]
    %v65 = vld [vmem:[#allocation2 + $0x54] sm:$0xf]
    %v66 = vld [vmem:[#allocation2 + $0x58] sm:$0xf]
    %v67 = vld [vmem:[#allocation2 + $0x5c] sm:$0xf]
    %v68 = vld [vmem:[#allocation2 + $0x60] sm:$0xf]
    %v69 = vld [vmem:[#allocation2 + $0x64] sm:$0xf]
    %v70 = vld [vmem:[#allocation2 + $0x68] sm:$0xf]
    %v71 = vld [vmem:[#allocation2 + $0x6c] sm:$0xf]
    %v72 = vld [vmem:[#allocation2 + $0x70] sm:$0xf]
    %v73 = vld [vmem:[#allocation2 + $0x74] sm:$0xf]
    %v74 = vld [vmem:[#allocation2 + $0x78] sm:$0xf]
    %v75 = vld [vmem:[#allocation2 + $0x7c] sm:$0xf]
    %v76 = vld [vmem:[#allocation2 + $0x80] sm:$0xf]
    %v77 = vld [vmem:[#allocation2 + $0x84] sm:$0xf]
    %v78 = vld [vmem:[#allocation2 + $0x88] sm:$0xf]
    %v79 = vld [vmem:[#allocation2 + $0x8c] sm:$0xf]
    %v80 = vld [vmem:[#allocation2 + $0x90] sm:$0xf]
    %v81 = vld [vmem:[#allocation2 + $0x94] sm:$0xf]
    %v82 = vld [vmem:[#allocation2 + $0x98] sm:$0xf]
    %v83 = vld [vmem:[#allocation2 + $0x9c] sm:$0xf]
    %v84 = vld [vmem:[#allocation2 + $0xa0] sm:$0xf]
    %v85 = vld [vmem:[#allocation2 + $0xa4] sm:$0xf]
    %v86 = vld [vmem:[#allocation2 + $0xa8] sm:$0xf]
    %v87 = vld [vmem:[#allocation2 + $0xac] sm:$0xf]
    %v88 = vld [vmem:[#allocation2 + $0xb0] sm:$0xf]
    %v89 = vld [vmem:[#allocation2 + $0xb4] sm:$0xf]
    %v90 = vld [vmem:[#allocation2 + $0xb8] sm:$0xf]
    %v91 = vld [vmem:[#allocation2 + $0xbc] sm:$0xf]
    %v92 = vld [vmem:[#allocation2 + $0xc0] sm:$0xf]
    %v93 = vld [vmem:[#allocation2 + $0xc4] sm:$0xf]
    %v94 = vld [vmem:[#allocation2 + $0xc8] sm:$0xf]
    %v95 = vld [vmem:[#allocation2 + $0xcc] sm:$0xf]
    %v96 = vld [vmem:[#allocation2 + $0xd0] sm:$0xf]
    %v97 = vld [vmem:[#allocation2 + $0xd4] sm:$0xf]
    %v98 = vld [vmem:[#allocation2 + $0xd8] sm:$0xf]
    %v99 = vld [vmem:[#allocation2 + $0xdc] sm:$0xf]
    %v100 = vld [vmem:[#allocation2 + $0xe0] sm:$0xf]
    %v101 = vld [vmem:[#allocation2 + $0xe4] sm:$0xf]
    %v102 = vld [vmem:[#allocation2 + $0xe8] sm:$0xf]
    %v103 = vld [vmem:[#allocation2 + $0xec] sm:$0xf]
    %v104 = vld [vmem:[#allocation2 + $0xf0] sm:$0xf]
    %v105 = vld [vmem:[#allocation2 + $0xf4] sm:$0xf]
    %v106 = vld [vmem:[#allocation2 + $0xf8] sm:$0xf]
    %v107 = vld [vmem:[#allocation2 + $0xfc] sm:$0xf]
    %v108 = vld [vmem:[%s2] sm:$0x1]
    %v110 = vlaneseq
    %v111 = vshrl.u32 %v110, 7
    %v112 = vsub.s32 0, %v111
    %v113 = vrot.slane %v108, %v112
    %v179 = vunpack.c.l.b16 %v44
    %v180 = vunpack.c.l.b16 %v45
    %v181 = vunpack.c.l.b16 %v46
    %v182 = vunpack.c.l.b16 %v47
    %v183 = vunpack.c.l.b16 %v48
    %v184 = vunpack.c.l.b16 %v49
    %v185 = vunpack.c.l.b16 %v50
    %v186 = vunpack.c.l.b16 %v51
    %v187 = vunpack.c.l.b16 %v52
    %v188 = vunpack.c.l.b16 %v53
    %v189 = vunpack.c.l.b16 %v54
    %v190 = vunpack.c.l.b16 %v55
    %v191 = vunpack.c.l.b16 %v56
    %v192 = vunpack.c.l.b16 %v57
    %v193 = vunpack.c.l.b16 %v58
    %v194 = vunpack.c.l.b16 %v59
    %v195 = vunpack.c.l.b16 %v60
    %v196 = vunpack.c.l.b16 %v61
    %v197 = vunpack.c.l.b16 %v62
    %v198 = vunpack.c.l.b16 %v63
    %v199 = vunpack.c.l.b16 %v64
    %v200 = vunpack.c.l.b16 %v65
    %v201 = vunpack.c.l.b16 %v66
    %v202 = vunpack.c.l.b16 %v67
    %v203 = vunpack.c.l.b16 %v68
    %v204 = vunpack.c.l.b16 %v69
    %v205 = vunpack.c.l.b16 %v70
    %v206 = vunpack.c.l.b16 %v71
    %v207 = vunpack.c.l.b16 %v72
    %v208 = vunpack.c.l.b16 %v73
    %v209 = vunpack.c.l.b16 %v74
    %v210 = vunpack.c.l.b16 %v75
    %v211 = vunpack.c.l.b16 %v76
    %v212 = vunpack.c.l.b16 %v77
    %v213 = vunpack.c.l.b16 %v78
    %v214 = vunpack.c.l.b16 %v79
    %v215 = vunpack.c.l.b16 %v80
    %v216 = vunpack.c.l.b16 %v81
    %v217 = vunpack.c.l.b16 %v82
    %v218 = vunpack.c.l.b16 %v83
    %v219 = vunpack.c.l.b16 %v84
    %v220 = vunpack.c.l.b16 %v85
    %v221 = vunpack.c.l.b16 %v86
    %v222 = vunpack.c.l.b16 %v87
    %v223 = vunpack.c.l.b16 %v88
    %v224 = vunpack.c.l.b16 %v89
    %v225 = vunpack.c.l.b16 %v90
    %v226 = vunpack.c.l.b16 %v91
    %v227 = vunpack.c.l.b16 %v92
    %v228 = vunpack.c.l.b16 %v93
    %v229 = vunpack.c.l.b16 %v94
    %v230 = vunpack.c.l.b16 %v95
    %v231 = vunpack.c.l.b16 %v96
    %v232 = vunpack.c.l.b16 %v97
    %v233 = vunpack.c.l.b16 %v98
    %v234 = vunpack.c.l.b16 %v99
    %v235 = vunpack.c.l.b16 %v100
    %v236 = vunpack.c.l.b16 %v101
    %v237 = vunpack.c.l.b16 %v102
    %v238 = vunpack.c.l.b16 %v103
    %v239 = vunpack.c.l.b16 %v104
    %v240 = vunpack.c.l.b16 %v105
    %v241 = vunpack.c.l.b16 %v106
    %v242 = vunpack.c.l.b16 %v107
    %v243 = vpack.c.b16 %v180, %v179
    %v244 = vpack.c.b16 %v182, %v181
    %v245 = vpack.c.b16 %v184, %v183
    %v246 = vpack.c.b16 %v186, %v185
    %v247 = vpack.c.b16 %v188, %v187
    %v248 = vpack.c.b16 %v190, %v189
    %v249 = vpack.c.b16 %v192, %v191
    %v250 = vpack.c.b16 %v194, %v193
    %v251 = vpack.c.b16 %v196, %v195
    %v252 = vpack.c.b16 %v198, %v197
    %v253 = vpack.c.b16 %v200, %v199
    %v254 = vpack.c.b16 %v202, %v201
    %v255 = vpack.c.b16 %v204, %v203
    %v256 = vpack.c.b16 %v206, %v205
    %v257 = vpack.c.b16 %v208, %v207
    %v258 = vpack.c.b16 %v210, %v209
    %v259 = vpack.c.b16 %v212, %v211
    %v260 = vpack.c.b16 %v214, %v213
    %v261 = vpack.c.b16 %v216, %v215
    %v262 = vpack.c.b16 %v218, %v217
    %v263 = vpack.c.b16 %v220, %v219
    %v264 = vpack.c.b16 %v222, %v221
    %v265 = vpack.c.b16 %v224, %v223
    %v266 = vpack.c.b16 %v226, %v225
    %v267 = vpack.c.b16 %v228, %v227
    %v268 = vpack.c.b16 %v230, %v229
    %v269 = vpack.c.b16 %v232, %v231
    %v270 = vpack.c.b16 %v234, %v233
    %v271 = vpack.c.b16 %v236, %v235
    %v272 = vpack.c.b16 %v238, %v237
    %v273 = vpack.c.b16 %v240, %v239
    %v274 = vpack.c.b16 %v242, %v241
    %307 = vmatprep.subr.bf16.mxu0 0
    %308 = vmatpush1.bf16.msra.mxu0 %v250
    %309 = vmatprep.subr.bf16.mxu0 0
    %310 = vmatpush1.bf16.msra.mxu0 %v249
    %311 = vmatprep.subr.bf16.mxu0 0
    %312 = vmatpush1.bf16.msra.mxu0 %v248
    %313 = vmatprep.subr.bf16.mxu0 0
    %314 = vmatpush1.bf16.msra.mxu0 %v247
    %315 = vmatprep.subr.bf16.mxu0 0
    %316 = vmatpush1.bf16.msra.mxu0 %v246
    %317 = vmatprep.subr.bf16.mxu0 0
    %318 = vmatpush1.bf16.msra.mxu0 %v245
    %319 = vmatprep.subr.bf16.mxu0 0
    %320 = vmatpush1.bf16.msra.mxu0 %v244
    %321 = vmatprep.subr.bf16.mxu0 0
    %322 = vmatpush1.bf16.msra.mxu0 %v243
    %323 = vmatprep.subr.bf16.mxu0 0
    %324 = vmatpush2.bf16.msra.mxu0 %v258
    %325 = vmatprep.subr.bf16.mxu0 0
    %326 = vmatpush2.bf16.msra.mxu0 %v257
    %327 = vmatprep.subr.bf16.mxu0 0
    %328 = vmatpush2.bf16.msra.mxu0 %v256
    %329 = vmatprep.subr.bf16.mxu0 0
    %330 = vmatpush2.bf16.msra.mxu0 %v255
    %331 = vmatprep.subr.bf16.mxu0 0
    %332 = vmatpush2.bf16.msra.mxu0 %v254
    %333 = vmatprep.subr.bf16.mxu0 0
    %334 = vmatpush2.bf16.msra.mxu0 %v253
    %335 = vmatprep.subr.bf16.mxu0 0
    %336 = vmatpush2.bf16.msra.mxu0 %v252
    %337 = vmatprep.subr.bf16.mxu0 0
    %338 = vmatpush2.bf16.msra.mxu0 %v251
    %339 = vmatprep.mubr.bf16.mxu0 %v41
    %340 = vmatmul.mubr.bf16.gmra.mxu0 %v40
    %v341 = vpop.f32.mrf.mxu0
    %v342 = vadd.f32 %v113, %v341
    %v343 = vpop.f32.mrf.mxu0
    %v344 = vpop.f32.mrf.mxu0
    %v345 = vpop.f32.mrf.mxu0
    %346 = vdwg.mxu0
    %347 = vmatprep.subr.bf16.mxu0 0
    %348 = vmatpush1.bf16.msra.mxu0 %v266
    %349 = vmatprep.subr.bf16.mxu0 0
    %350 = vmatpush1.bf16.msra.mxu0 %v265
    %351 = vmatprep.subr.bf16.mxu0 0
    %352 = vmatpush1.bf16.msra.mxu0 %v264
    %353 = vmatprep.subr.bf16.mxu0 0
    %354 = vmatpush1.bf16.msra.mxu0 %v263
    %355 = vmatprep.subr.bf16.mxu0 0
    %356 = vmatpush1.bf16.msra.mxu0 %v262
    %357 = vmatprep.subr.bf16.mxu0 0
    %358 = vmatpush1.bf16.msra.mxu0 %v261
    %359 = vmatprep.subr.bf16.mxu0 0
    %360 = vmatpush1.bf16.msra.mxu0 %v260
    %361 = vmatprep.subr.bf16.mxu0 0
    %362 = vmatpush1.bf16.msra.mxu0 %v259
    %363 = vmatprep.subr.bf16.mxu0 0
    %364 = vmatpush2.bf16.msra.mxu0 %v274
    %365 = vmatprep.subr.bf16.mxu0 0
    %366 = vmatpush2.bf16.msra.mxu0 %v273
    %367 = vmatprep.subr.bf16.mxu0 0
    %368 = vmatpush2.bf16.msra.mxu0 %v272
    %369 = vmatprep.subr.bf16.mxu0 0
    %370 = vmatpush2.bf16.msra.mxu0 %v271
    %371 = vmatprep.subr.bf16.mxu0 0
    %372 = vmatpush2.bf16.msra.mxu0 %v270
    %373 = vmatprep.subr.bf16.mxu0 0
    %374 = vmatpush2.bf16.msra.mxu0 %v269
    %375 = vmatprep.subr.bf16.mxu0 0
    %376 = vmatpush2.bf16.msra.mxu0 %v268
    %377 = vmatprep.subr.bf16.mxu0 0
    %378 = vmatpush2.bf16.msra.mxu0 %v267
    %379 = vmatprep.mubr.bf16.mxu0 %v43
    %380 = vmatmul.mubr.bf16.gmra.mxu0 %v42
    %v381 = vpop.f32.mrf.mxu0
    %v382 = vadd.f32 %v342, %v381
    %v383 = vpop.f32.mrf.mxu0
    %v384 = vpop.f32.mrf.mxu0
    %v385 = vpop.f32.mrf.mxu0
    %386 = vdwg.mxu0
    %v387 = vmax.f32 %v382, 0.0
    %v388 = vpack.c.bf16 %v387, %v387
    %v389 = vld [vmem:[%s3] sm:$0xf]
    %v390 = vld [vmem:[%s3 + $0x4] sm:$0xf]
    %v391 = vld [vmem:[%s3 + $0x8] sm:$0xf]
    %v392 = vld [vmem:[%s3 + $0xc] sm:$0xf]
    %v393 = vld [vmem:[%s3 + $0x10] sm:$0xf]
    %v394 = vld [vmem:[%s3 + $0x14] sm:$0xf]
    %v395 = vld [vmem:[%s3 + $0x18] sm:$0xf]
    %v396 = vld [vmem:[%s3 + $0x1c] sm:$0xf]
    %v397 = vld [vmem:[%s3 + $0x20] sm:$0xf]
    %v398 = vld [vmem:[%s3 + $0x24] sm:$0xf]
    %v399 = vld [vmem:[%s3 + $0x28] sm:$0xf]
    %v400 = vld [vmem:[%s3 + $0x2c] sm:$0xf]
    %v401 = vld [vmem:[%s3 + $0x30] sm:$0xf]
    %v402 = vld [vmem:[%s3 + $0x34] sm:$0xf]
    %v403 = vld [vmem:[%s3 + $0x38] sm:$0xf]
    %v404 = vld [vmem:[%s3 + $0x3c] sm:$0xf]
    %v405 = vld [vmem:[%s4] sm:$0x1]
    %v407 = vlaneseq
    %v408 = vshrl.u32 %v407, 7
    %v409 = vsub.s32 0, %v408
    %v410 = vrot.slane %v405, %v409
    %v428 = vunpack.c.l.b16 %v389
    %v429 = vunpack.c.l.b16 %v390
    %v430 = vunpack.c.l.b16 %v391
    %v431 = vunpack.c.l.b16 %v392
    %v432 = vunpack.c.l.b16 %v393
    %v433 = vunpack.c.l.b16 %v394
    %v434 = vunpack.c.l.b16 %v395
    %v435 = vunpack.c.l.b16 %v396
    %v436 = vunpack.c.l.b16 %v397
    %v437 = vunpack.c.l.b16 %v398
    %v438 = vunpack.c.l.b16 %v399
    %v439 = vunpack.c.l.b16 %v400
    %v440 = vunpack.c.l.b16 %v401
    %v441 = vunpack.c.l.b16 %v402
    %v442 = vunpack.c.l.b16 %v403
    %v443 = vunpack.c.l.b16 %v404
    %v444 = vpack.c.b16 %v429, %v428
    %v445 = vpack.c.b16 %v431, %v430
    %v446 = vpack.c.b16 %v433, %v432
    %v447 = vpack.c.b16 %v435, %v434
    %v448 = vpack.c.b16 %v437, %v436
    %v449 = vpack.c.b16 %v439, %v438
    %v450 = vpack.c.b16 %v441, %v440
    %v451 = vpack.c.b16 %v443, %v442
    %460 = vmatprep.subr.bf16.mxu0 0
    %461 = vmatpush1.bf16.msra.mxu0 %v451
    %462 = vmatprep.subr.bf16.mxu0 0
    %463 = vmatpush1.bf16.msra.mxu0 %v450
    %464 = vmatprep.subr.bf16.mxu0 0
    %465 = vmatpush1.bf16.msra.mxu0 %v449
    %466 = vmatprep.subr.bf16.mxu0 0
    %467 = vmatpush1.bf16.msra.mxu0 %v448
    %468 = vmatprep.subr.bf16.mxu0 0
    %469 = vmatpush1.bf16.msra.mxu0 %v447
    %470 = vmatprep.subr.bf16.mxu0 0
    %471 = vmatpush1.bf16.msra.mxu0 %v446
    %472 = vmatprep.subr.bf16.mxu0 0
    %473 = vmatpush1.bf16.msra.mxu0 %v445
    %474 = vmatprep.subr.bf16.mxu0 0
    %475 = vmatpush1.bf16.msra.mxu0 %v444
    %476 = vmatprep.subr.bf16.mxu0 0
    %477 = vmatpush2.bf16.msra.mxu0 0
    %478 = vmatprep.subr.bf16.mxu0 0
    %479 = vmatpush2.bf16.msra.mxu0 0
    %480 = vmatprep.subr.bf16.mxu0 0
    %481 = vmatpush2.bf16.msra.mxu0 0
    %482 = vmatprep.subr.bf16.mxu0 0
    %483 = vmatpush2.bf16.msra.mxu0 0
    %484 = vmatprep.subr.bf16.mxu0 0
    %485 = vmatpush2.bf16.msra.mxu0 0
    %486 = vmatprep.subr.bf16.mxu0 0
    %487 = vmatpush2.bf16.msra.mxu0 0
    %488 = vmatprep.subr.bf16.mxu0 0
    %489 = vmatpush2.bf16.msra.mxu0 0
    %490 = vmatprep.subr.bf16.mxu0 0
    %491 = vmatpush2.bf16.msra.mxu0 0
    %492 = vmatprep.mubr.bf16.mxu0 0
    %493 = vmatmul.mubr.bf16.gmra.mxu0 %v388
    %v494 = vpop.f32.mrf.mxu0
    %v495 = vadd.f32 %v410, %v494
    %v496 = vpop.f32.mrf.mxu0
    %v497 = vpop.f32.mrf.mxu0
    %v498 = vpop.f32.mrf.mxu0
    %499 = vdwg.mxu0
    %v500 = vmax.f32 %v495, 0.0
    %vm501 = vcmask 80896
    %502 = vst.msk [vmem:[#allocation5] sm:$0xff] %vm501, %v500
    // Predicated region
    $region26: #{tpu_custom_call.1} parent=1 // pred_check
      _
    $region27: #{tpu_custom_call.1} parent=1 // pred_check_branch
      %504 = sbr.rel (0) target = $region29
    $region28: #{tpu_custom_call.1} parent=1 // pred_region
      %s506 = ssub.s32 128, 128
      %507 = vsyncadd [#allocation4], %s506
      %s509 = sshll.u32 [#allocation5], 4
      %s510 = int_to_ptr.vmem [resolvable:$true] %s509
      %512 = dma.vmem_to_hbm [thread:$0]  %s510, 128, %s5, [#allocation4]
    $region29: #{tpu_custom_call.1} parent=1 // pred_fallthru
      _
    // Predicated region
    $region30: #{tpu_custom_call.1} parent=1 // pred_check
      _
    $region31: #{tpu_custom_call.1} parent=1 // pred_check_branch
      %514 = sbr.rel (0) target = $region33
    $region32: #{tpu_custom_call.1} parent=1 // pred_region
      %515 = dma.done [#allocation4], 128
    $region33: #{tpu_custom_call.1} parent=1 // pred_fallthru
      _
    %516 = vsyncpa [#allocation3], 1
    %517 = vsyncpa [#allocation4], 1

</llo_original>
